<compile_context>
chip_gen: v6e
topology: v6e:2x2x1
jax: 0.10.0
libtpu: 0.0.40
codegen_flags: <defaults>
</compile_context>

<pallas_src>
import functools

import jax
import jax.numpy as jnp
from jax.experimental import pallas as pl
from jax.experimental.pallas import tpu as pltpu

VMEM = pltpu.MemorySpace.VMEM


# --------------------------------------------------------------------------- kernel
def _interaction_gate_kernel(action_h_ref, goal_h_ref, goal_ref, action_ref,
                             dist_w_ref, dist_b_ref, gate_w_ref, gate_b_ref,
                             out_ref, *, n):
    """Fused InteractionGate.forward.

    out[i, j, :] = eye(i,j) * goal_h[j]
                 + (1 - eye(i,j)) * sigmoid(gateFC(relu(distEmb(dist[i,j])))) * tanh(action_h[j])
    with dist[i, j] = [action[i], goal[i], action[j], goal[j]]   (8 features).
    """
    action_h = action_h_ref[...]          # (n, H)
    goal_h = goal_h_ref[...]              # (n, H)
    goal = goal_ref[...]                  # (n, 2)
    action = action_ref[...]              # (n, 2)
    w_d = dist_w_ref[...]                 # (8, De); rows: action_i, goal_i, action_j, goal_j
    b_d = dist_b_ref[...]                 # (1, De)
    w_g = gate_w_ref[...]                 # (De, H)
    b_g = gate_b_ref[...]                 # (1, H)

    # distEmbedding(dist) split along K so the (n, n, 8) tensor never exists:
    #   dist @ W = [action_i, goal_i] @ W[0:4]  +  [action_j, goal_j] @ W[4:8]
    self_part = (jnp.dot(action, w_d[0:2, :], preferred_element_type=jnp.float32)
                 + jnp.dot(goal, w_d[2:4, :], preferred_element_type=jnp.float32))    # (n, De), indexed by i
    other_part = (jnp.dot(action, w_d[4:6, :], preferred_element_type=jnp.float32)
                  + jnp.dot(goal, w_d[6:8, :], preferred_element_type=jnp.float32))   # (n, De), indexed by j
    other_part = other_part + b_d

    tanh_action = jnp.tanh(action_h)                                  # (n, H), indexed by j
    col_ids = jax.lax.broadcasted_iota(jnp.int32, (n, 1), 0)          # (n, 1)

    # Unrolled over the static row index i: everything stays 2-D (no reshapes).
    for i in range(n):
        demb_i = jnp.maximum(self_part[i:i + 1, :] + other_part, 0.0)          # (n, De)  relu(distEmbedding)
        gate_i = jax.nn.sigmoid(
            jnp.dot(demb_i, w_g, preferred_element_type=jnp.float32) + b_g)    # (n, H)   sigmoid(gateFC)
        gate_action_i = gate_i * tanh_action                                   # (n, H)
        mask_i = (col_ids == i).astype(jnp.float32)                            # (n, 1)   row i of eye(n)
        out_ref[i] = mask_i * goal_h + (1.0 - mask_i) * gate_action_i


def interaction_gate(action_hidden_state, goal_hidden_state, goal, action, params):
    """action_hidden_state/goal_hidden_state: (n, H); goal/action: (n, 2) -> (n, n, H)."""
    n, H = action_hidden_state.shape
    kernel = functools.partial(_interaction_gate_kernel, n=n)
    return pl.pallas_call(
        kernel,
        out_shape=jax.ShapeDtypeStruct((n, n, H), jnp.float32),
        in_specs=[pl.BlockSpec(memory_space=VMEM)] * 8,
        out_specs=pl.BlockSpec(memory_space=VMEM),
    )(action_hidden_state, goal_hidden_state, goal, action,
      params["dist_w"], params["dist_b"], params["gate_w"], params["gate_b"])


# ------------------------------------------------------------------ pure-JAX reference
def interaction_gate_ref(action_hidden_state, goal_hidden_state, goal, action, params):
    """Direct transcription of the PyTorch forward (for validation)."""
    n, H = action_hidden_state.shape
    goal1 = jnp.broadcast_to(goal[None, :, :], (n, n, 2))        # [i,j] = goal[j]
    action1 = jnp.broadcast_to(action[None, :, :], (n, n, 2))    # [i,j] = action[j]
    goal2 = jnp.transpose(goal1, (1, 0, 2))                      # [i,j] = goal[i]
    action2 = jnp.transpose(action1, (1, 0, 2))                  # [i,j] = action[i]
    dist = jnp.concatenate([action2, goal2, action1, goal1], axis=-1)          # (n, n, 8)
    g = jax.nn.relu(jnp.dot(dist, params["dist_w"]) + params["dist_b"][0])     # (n, n, De)
    gate = jax.nn.sigmoid(jnp.dot(g, params["gate_w"]) + params["gate_b"][0])  # (n, n, H)
    temp_action = jnp.broadcast_to(action_hidden_state[None, :, :], (n, n, H))
    gate_action = gate * jnp.tanh(temp_action)
    temp_goal = jnp.broadcast_to(goal_hidden_state[None, :, :], (n, n, H))
    mask_goal = jnp.eye(n, dtype=jnp.float32)[:, :, None]
    return mask_goal * temp_goal + (1.0 - mask_goal) * gate_action


# --------------------------------------------------------------------------------- main
if __name__ == "__main__":
    # small config consistent with the module
    n = 6                             # number of pedestrians in the segment
    distance_embedding_dim = 16
    action_decoder_hidden_dim = 32

    key = jax.random.PRNGKey(0)
    ks = iter(jax.random.split(key, 8))

    def init_linear(kk, in_dim, out_dim):
        k1, k2 = jax.random.split(kk)
        s = 1.0 / float(in_dim) ** 0.5
        w = jax.random.uniform(k1, (in_dim, out_dim), jnp.float32, -s, s)
        b = jax.random.uniform(k2, (1, out_dim), jnp.float32, -s, s)
        return w, b

    params = {}
    params["dist_w"], params["dist_b"] = init_linear(next(ks), 8, distance_embedding_dim)
    params["gate_w"], params["gate_b"] = init_linear(next(ks), distance_embedding_dim,
                                                     action_decoder_hidden_dim)

    action_hidden_state = jax.random.normal(next(ks), (n, action_decoder_hidden_dim), jnp.float32)
    goal_hidden_state = jax.random.normal(next(ks), (n, action_decoder_hidden_dim), jnp.float32)
    goal = jax.random.normal(next(ks), (n, 2), jnp.float32)
    action = jax.random.normal(next(ks), (n, 2), jnp.float32)

    out = jax.jit(interaction_gate)(action_hidden_state, goal_hidden_state, goal, action, params)
    out = jax.block_until_ready(out)

    assert out.shape == (n, n, action_decoder_hidden_dim), out.shape
    assert bool(jnp.all(jnp.isfinite(out)))

    # diagonal must be a pass-through of goal_hidden_state (mask_goal = eye)
    diag = out[jnp.arange(n), jnp.arange(n), :]
    assert bool(jnp.allclose(diag, goal_hidden_state, rtol=0.0, atol=1e-6))

    # full check against the direct PyTorch-equivalent reference
    ref = interaction_gate_ref(action_hidden_state, goal_hidden_state, goal, action, params)
    assert bool(jnp.allclose(out, ref, rtol=2e-2, atol=2e-2)), float(jnp.max(jnp.abs(out - ref)))

    print("KERNEL_OK")
</pallas_src>

<mosaic_0001>
module attributes {stable_mosaic.version = 11 : i64} {
  func.func @_interaction_gate_kernel(%arg0: memref<6x32xf32, #tpu.memory_space<vmem>>, %arg1: memref<6x32xf32, #tpu.memory_space<vmem>>, %arg2: memref<6x2xf32, #tpu.memory_space<vmem>>, %arg3: memref<6x2xf32, #tpu.memory_space<vmem>>, %arg4: memref<8x16xf32, #tpu.memory_space<vmem>>, %arg5: memref<1x16xf32, #tpu.memory_space<vmem>>, %arg6: memref<16x32xf32, #tpu.memory_space<vmem>>, %arg7: memref<1x32xf32, #tpu.memory_space<vmem>>, %arg8: memref<6x6x32xf32, #tpu.memory_space<vmem>>) attributes {dimension_semantics = [], scalar_prefetch = 0 : i64, scratch_operands = 0 : i64, tpu.core_type = #tpu.core_type<tc>} {
    %c0 = arith.constant 0 : index
    %c0_0 = arith.constant 0 : index
    %0 = vector.load %arg0[%c0, %c0_0] : memref<6x32xf32, #tpu.memory_space<vmem>>, vector<6x32xf32>
    %c0_1 = arith.constant 0 : index
    %c0_2 = arith.constant 0 : index
    %1 = vector.load %arg1[%c0_1, %c0_2] : memref<6x32xf32, #tpu.memory_space<vmem>>, vector<6x32xf32>
    %c0_3 = arith.constant 0 : index
    %c0_4 = arith.constant 0 : index
    %2 = vector.load %arg2[%c0_3, %c0_4] : memref<6x2xf32, #tpu.memory_space<vmem>>, vector<6x2xf32>
    %c0_5 = arith.constant 0 : index
    %c0_6 = arith.constant 0 : index
    %3 = vector.load %arg3[%c0_5, %c0_6] : memref<6x2xf32, #tpu.memory_space<vmem>>, vector<6x2xf32>
    %c0_7 = arith.constant 0 : index
    %c0_8 = arith.constant 0 : index
    %4 = vector.load %arg4[%c0_7, %c0_8] : memref<8x16xf32, #tpu.memory_space<vmem>>, vector<8x16xf32>
    %c0_9 = arith.constant 0 : index
    %c0_10 = arith.constant 0 : index
    %5 = vector.load %arg5[%c0_9, %c0_10] : memref<1x16xf32, #tpu.memory_space<vmem>>, vector<1x16xf32>
    %c0_11 = arith.constant 0 : index
    %c0_12 = arith.constant 0 : index
    %6 = vector.load %arg6[%c0_11, %c0_12] : memref<16x32xf32, #tpu.memory_space<vmem>>, vector<16x32xf32>
    %c0_13 = arith.constant 0 : index
    %c0_14 = arith.constant 0 : index
    %7 = vector.load %arg7[%c0_13, %c0_14] : memref<1x32xf32, #tpu.memory_space<vmem>>, vector<1x32xf32>
    %8 = vector.extract_strided_slice %4 {offsets = [0, 0], sizes = [2, 16], strides = [1, 1]} : vector<8x16xf32> to vector<2x16xf32>
    %cst = arith.constant dense<0.000000e+00> : vector<6x16xf32>
    %9 = tpu.matmul %3, %8, %cst {dimension_numbers = #tpu.dot_dimension_numbers<[1], [0], [0], [1], [0, 0, 1, 1], [], []>} : vector<6x2xf32>, vector<2x16xf32>, vector<6x16xf32> -> vector<6x16xf32>
    %10 = vector.extract_strided_slice %4 {offsets = [2, 0], sizes = [2, 16], strides = [1, 1]} : vector<8x16xf32> to vector<2x16xf32>
    %cst_15 = arith.constant dense<0.000000e+00> : vector<6x16xf32>
    %11 = tpu.matmul %2, %10, %cst_15 {dimension_numbers = #tpu.dot_dimension_numbers<[1], [0], [0], [1], [0, 0, 1, 1], [], []>} : vector<6x2xf32>, vector<2x16xf32>, vector<6x16xf32> -> vector<6x16xf32>
    %12 = arith.addf %9, %11 : vector<6x16xf32>
    %13 = vector.extract_strided_slice %4 {offsets = [4, 0], sizes = [2, 16], strides = [1, 1]} : vector<8x16xf32> to vector<2x16xf32>
    %cst_16 = arith.constant dense<0.000000e+00> : vector<6x16xf32>
    %14 = tpu.matmul %3, %13, %cst_16 {dimension_numbers = #tpu.dot_dimension_numbers<[1], [0], [0], [1], [0, 0, 1, 1], [], []>} : vector<6x2xf32>, vector<2x16xf32>, vector<6x16xf32> -> vector<6x16xf32>
    %15 = vector.extract_strided_slice %4 {offsets = [6, 0], sizes = [2, 16], strides = [1, 1]} : vector<8x16xf32> to vector<2x16xf32>
    %cst_17 = arith.constant dense<0.000000e+00> : vector<6x16xf32>
    %16 = tpu.matmul %2, %15, %cst_17 {dimension_numbers = #tpu.dot_dimension_numbers<[1], [0], [0], [1], [0, 0, 1, 1], [], []>} : vector<6x2xf32>, vector<2x16xf32>, vector<6x16xf32> -> vector<6x16xf32>
    %17 = arith.addf %14, %16 : vector<6x16xf32>
    %18 = vector.broadcast %5 : vector<1x16xf32> to vector<6x16xf32>
    %19 = arith.addf %17, %18 : vector<6x16xf32>
    %20 = math.tanh %0 : vector<6x32xf32>
    %21 = tpu.iota {dimensions = array<i32: 0>} : vector<6x1xi32>
    %22 = vector.extract_strided_slice %12 {offsets = [0, 0], sizes = [1, 16], strides = [1, 1]} : vector<6x16xf32> to vector<1x16xf32>
    %23 = vector.broadcast %22 : vector<1x16xf32> to vector<6x16xf32>
    %24 = arith.addf %23, %19 : vector<6x16xf32>
    %cst_18 = arith.constant 0.000000e+00 : f32
    %25 = vector.broadcast %cst_18 : f32 to vector<6x16xf32>
    %26 = arith.maximumf %24, %25 : vector<6x16xf32>
    %cst_19 = arith.constant dense<0.000000e+00> : vector<6x32xf32>
    %27 = tpu.matmul %26, %6, %cst_19 {dimension_numbers = #tpu.dot_dimension_numbers<[1], [0], [0], [1], [0, 0, 1, 1], [], []>} : vector<6x16xf32>, vector<16x32xf32>, vector<6x32xf32> -> vector<6x32xf32>
    %28 = vector.broadcast %7 : vector<1x32xf32> to vector<6x32xf32>
    %29 = arith.addf %27, %28 : vector<6x32xf32>
    %30 = arith.negf %29 : vector<6x32xf32>
    %31 = math.exp %30 : vector<6x32xf32>
    %cst_20 = arith.constant 1.000000e+00 : f32
    %32 = vector.broadcast %cst_20 : f32 to vector<6x32xf32>
    %33 = arith.addf %32, %31 : vector<6x32xf32>
    %34 = arith.divf %32, %33 : vector<6x32xf32>
    %35 = arith.mulf %34, %20 : vector<6x32xf32>
    %c0_i32 = arith.constant 0 : i32
    %36 = vector.broadcast %c0_i32 : i32 to vector<6x1xi32>
    %37 = arith.cmpi eq, %21, %36 : vector<6x1xi32>
    %38 = arith.extui %37 : vector<6x1xi1> to vector<6x1xi32>
    %39 = arith.sitofp %38 : vector<6x1xi32> to vector<6x1xf32>
    %40 = vector.broadcast %39 : vector<6x1xf32> to vector<6x32xf32>
    %41 = arith.mulf %40, %1 : vector<6x32xf32>
    %cst_21 = arith.constant 1.000000e+00 : f32
    %42 = vector.broadcast %cst_21 : f32 to vector<6x1xf32>
    %43 = arith.subf %42, %39 : vector<6x1xf32>
    %44 = vector.broadcast %43 : vector<6x1xf32> to vector<6x32xf32>
    %45 = arith.mulf %44, %35 : vector<6x32xf32>
    %46 = arith.addf %41, %45 : vector<6x32xf32>
    %c0_22 = arith.constant 0 : index
    %c0_23 = arith.constant 0 : index
    %c0_24 = arith.constant 0 : index
    %47 = vector.load %arg8[%c0_22, %c0_23, %c0_24] : memref<6x6x32xf32, #tpu.memory_space<vmem>>, vector<1x6x32xf32>
    %48 = vector.shape_cast %47 : vector<1x6x32xf32> to vector<6x32xf32>
    %49 = vector.shape_cast %46 : vector<6x32xf32> to vector<1x6x32xf32>
    tpu.vector_store %arg8[%c0_22, %c0_23, %c0_24], %49 {strides = array<i32>} : memref<6x6x32xf32, #tpu.memory_space<vmem>>, vector<1x6x32xf32>,
    %50 = vector.extract_strided_slice %12 {offsets = [1, 0], sizes = [1, 16], strides = [1, 1]} : vector<6x16xf32> to vector<1x16xf32>
    %51 = vector.broadcast %50 : vector<1x16xf32> to vector<6x16xf32>
    %52 = arith.addf %51, %19 : vector<6x16xf32>
    %cst_25 = arith.constant 0.000000e+00 : f32
    %53 = vector.broadcast %cst_25 : f32 to vector<6x16xf32>
    %54 = arith.maximumf %52, %53 : vector<6x16xf32>
    %cst_26 = arith.constant dense<0.000000e+00> : vector<6x32xf32>
    %55 = tpu.matmul %54, %6, %cst_26 {dimension_numbers = #tpu.dot_dimension_numbers<[1], [0], [0], [1], [0, 0, 1, 1], [], []>} : vector<6x16xf32>, vector<16x32xf32>, vector<6x32xf32> -> vector<6x32xf32>
    %56 = vector.broadcast %7 : vector<1x32xf32> to vector<6x32xf32>
    %57 = arith.addf %55, %56 : vector<6x32xf32>
    %58 = arith.negf %57 : vector<6x32xf32>
    %59 = math.exp %58 : vector<6x32xf32>
    %cst_27 = arith.constant 1.000000e+00 : f32
    %60 = vector.broadcast %cst_27 : f32 to vector<6x32xf32>
    %61 = arith.addf %60, %59 : vector<6x32xf32>
    %62 = arith.divf %60, %61 : vector<6x32xf32>
    %63 = arith.mulf %62, %20 : vector<6x32xf32>
    %c1_i32 = arith.constant 1 : i32
    %64 = vector.broadcast %c1_i32 : i32 to vector<6x1xi32>
    %65 = arith.cmpi eq, %21, %64 : vector<6x1xi32>
    %66 = arith.extui %65 : vector<6x1xi1> to vector<6x1xi32>
    %67 = arith.sitofp %66 : vector<6x1xi32> to vector<6x1xf32>
    %68 = vector.broadcast %67 : vector<6x1xf32> to vector<6x32xf32>
    %69 = arith.mulf %68, %1 : vector<6x32xf32>
    %cst_28 = arith.constant 1.000000e+00 : f32
    %70 = vector.broadcast %cst_28 : f32 to vector<6x1xf32>
    %71 = arith.subf %70, %67 : vector<6x1xf32>
    %72 = vector.broadcast %71 : vector<6x1xf32> to vector<6x32xf32>
    %73 = arith.mulf %72, %63 : vector<6x32xf32>
    %74 = arith.addf %69, %73 : vector<6x32xf32>
    %c1 = arith.constant 1 : index
    %c0_29 = arith.constant 0 : index
    %c0_30 = arith.constant 0 : index
    %75 = vector.load %arg8[%c1, %c0_29, %c0_30] : memref<6x6x32xf32, #tpu.memory_space<vmem>>, vector<1x6x32xf32>
    %76 = vector.shape_cast %75 : vector<1x6x32xf32> to vector<6x32xf32>
    %77 = vector.shape_cast %74 : vector<6x32xf32> to vector<1x6x32xf32>
    tpu.vector_store %arg8[%c1, %c0_29, %c0_30], %77 {strides = array<i32>} : memref<6x6x32xf32, #tpu.memory_space<vmem>>, vector<1x6x32xf32>,
    %78 = vector.extract_strided_slice %12 {offsets = [2, 0], sizes = [1, 16], strides = [1, 1]} : vector<6x16xf32> to vector<1x16xf32>
    %79 = vector.broadcast %78 : vector<1x16xf32> to vector<6x16xf32>
    %80 = arith.addf %79, %19 : vector<6x16xf32>
    %cst_31 = arith.constant 0.000000e+00 : f32
    %81 = vector.broadcast %cst_31 : f32 to vector<6x16xf32>
    %82 = arith.maximumf %80, %81 : vector<6x16xf32>
    %cst_32 = arith.constant dense<0.000000e+00> : vector<6x32xf32>
    %83 = tpu.matmul %82, %6, %cst_32 {dimension_numbers = #tpu.dot_dimension_numbers<[1], [0], [0], [1], [0, 0, 1, 1], [], []>} : vector<6x16xf32>, vector<16x32xf32>, vector<6x32xf32> -> vector<6x32xf32>
    %84 = vector.broadcast %7 : vector<1x32xf32> to vector<6x32xf32>
    %85 = arith.addf %83, %84 : vector<6x32xf32>
    %86 = arith.negf %85 : vector<6x32xf32>
    %87 = math.exp %86 : vector<6x32xf32>
    %cst_33 = arith.constant 1.000000e+00 : f32
    %88 = vector.broadcast %cst_33 : f32 to vector<6x32xf32>
    %89 = arith.addf %88, %87 : vector<6x32xf32>
    %90 = arith.divf %88, %89 : vector<6x32xf32>
    %91 = arith.mulf %90, %20 : vector<6x32xf32>
    %c2_i32 = arith.constant 2 : i32
    %92 = vector.broadcast %c2_i32 : i32 to vector<6x1xi32>
    %93 = arith.cmpi eq, %21, %92 : vector<6x1xi32>
    %94 = arith.extui %93 : vector<6x1xi1> to vector<6x1xi32>
    %95 = arith.sitofp %94 : vector<6x1xi32> to vector<6x1xf32>
    %96 = vector.broadcast %95 : vector<6x1xf32> to vector<6x32xf32>
    %97 = arith.mulf %96, %1 : vector<6x32xf32>
    %cst_34 = arith.constant 1.000000e+00 : f32
    %98 = vector.broadcast %cst_34 : f32 to vector<6x1xf32>
    %99 = arith.subf %98, %95 : vector<6x1xf32>
    %100 = vector.broadcast %99 : vector<6x1xf32> to vector<6x32xf32>
    %101 = arith.mulf %100, %91 : vector<6x32xf32>
    %102 = arith.addf %97, %101 : vector<6x32xf32>
    %c2 = arith.constant 2 : index
    %c0_35 = arith.constant 0 : index
    %c0_36 = arith.constant 0 : index
    %103 = vector.load %arg8[%c2, %c0_35, %c0_36] : memref<6x6x32xf32, #tpu.memory_space<vmem>>, vector<1x6x32xf32>
    %104 = vector.shape_cast %103 : vector<1x6x32xf32> to vector<6x32xf32>
    %105 = vector.shape_cast %102 : vector<6x32xf32> to vector<1x6x32xf32>
    tpu.vector_store %arg8[%c2, %c0_35, %c0_36], %105 {strides = array<i32>} : memref<6x6x32xf32, #tpu.memory_space<vmem>>, vector<1x6x32xf32>,
    %106 = vector.extract_strided_slice %12 {offsets = [3, 0], sizes = [1, 16], strides = [1, 1]} : vector<6x16xf32> to vector<1x16xf32>
    %107 = vector.broadcast %106 : vector<1x16xf32> to vector<6x16xf32>
    %108 = arith.addf %107, %19 : vector<6x16xf32>
    %cst_37 = arith.constant 0.000000e+00 : f32
    %109 = vector.broadcast %cst_37 : f32 to vector<6x16xf32>
    %110 = arith.maximumf %108, %109 : vector<6x16xf32>
    %cst_38 = arith.constant dense<0.000000e+00> : vector<6x32xf32>
    %111 = tpu.matmul %110, %6, %cst_38 {dimension_numbers = #tpu.dot_dimension_numbers<[1], [0], [0], [1], [0, 0, 1, 1], [], []>} : vector<6x16xf32>, vector<16x32xf32>, vector<6x32xf32> -> vector<6x32xf32>
    %112 = vector.broadcast %7 : vector<1x32xf32> to vector<6x32xf32>
    %113 = arith.addf %111, %112 : vector<6x32xf32>
    %114 = arith.negf %113 : vector<6x32xf32>
    %115 = math.exp %114 : vector<6x32xf32>
    %cst_39 = arith.constant 1.000000e+00 : f32
    %116 = vector.broadcast %cst_39 : f32 to vector<6x32xf32>
    %117 = arith.addf %116, %115 : vector<6x32xf32>
    %118 = arith.divf %116, %117 : vector<6x32xf32>
    %119 = arith.mulf %118, %20 : vector<6x32xf32>
    %c3_i32 = arith.constant 3 : i32
    %120 = vector.broadcast %c3_i32 : i32 to vector<6x1xi32>
    %121 = arith.cmpi eq, %21, %120 : vector<6x1xi32>
    %122 = arith.extui %121 : vector<6x1xi1> to vector<6x1xi32>
    %123 = arith.sitofp %122 : vector<6x1xi32> to vector<6x1xf32>
    %124 = vector.broadcast %123 : vector<6x1xf32> to vector<6x32xf32>
    %125 = arith.mulf %124, %1 : vector<6x32xf32>
    %cst_40 = arith.constant 1.000000e+00 : f32
    %126 = vector.broadcast %cst_40 : f32 to vector<6x1xf32>
    %127 = arith.subf %126, %123 : vector<6x1xf32>
    %128 = vector.broadcast %127 : vector<6x1xf32> to vector<6x32xf32>
    %129 = arith.mulf %128, %119 : vector<6x32xf32>
    %130 = arith.addf %125, %129 : vector<6x32xf32>
    %c3 = arith.constant 3 : index
    %c0_41 = arith.constant 0 : index
    %c0_42 = arith.constant 0 : index
    %131 = vector.load %arg8[%c3, %c0_41, %c0_42] : memref<6x6x32xf32, #tpu.memory_space<vmem>>, vector<1x6x32xf32>
    %132 = vector.shape_cast %131 : vector<1x6x32xf32> to vector<6x32xf32>
    %133 = vector.shape_cast %130 : vector<6x32xf32> to vector<1x6x32xf32>
    tpu.vector_store %arg8[%c3, %c0_41, %c0_42], %133 {strides = array<i32>} : memref<6x6x32xf32, #tpu.memory_space<vmem>>, vector<1x6x32xf32>,
    %134 = vector.extract_strided_slice %12 {offsets = [4, 0], sizes = [1, 16], strides = [1, 1]} : vector<6x16xf32> to vector<1x16xf32>
    %135 = vector.broadcast %134 : vector<1x16xf32> to vector<6x16xf32>
    %136 = arith.addf %135, %19 : vector<6x16xf32>
    %cst_43 = arith.constant 0.000000e+00 : f32
    %137 = vector.broadcast %cst_43 : f32 to vector<6x16xf32>
    %138 = arith.maximumf %136, %137 : vector<6x16xf32>
    %cst_44 = arith.constant dense<0.000000e+00> : vector<6x32xf32>
    %139 = tpu.matmul %138, %6, %cst_44 {dimension_numbers = #tpu.dot_dimension_numbers<[1], [0], [0], [1], [0, 0, 1, 1], [], []>} : vector<6x16xf32>, vector<16x32xf32>, vector<6x32xf32> -> vector<6x32xf32>
    %140 = vector.broadcast %7 : vector<1x32xf32> to vector<6x32xf32>
    %141 = arith.addf %139, %140 : vector<6x32xf32>
    %142 = arith.negf %141 : vector<6x32xf32>
    %143 = math.exp %142 : vector<6x32xf32>
    %cst_45 = arith.constant 1.000000e+00 : f32
    %144 = vector.broadcast %cst_45 : f32 to vector<6x32xf32>
    %145 = arith.addf %144, %143 : vector<6x32xf32>
    %146 = arith.divf %144, %145 : vector<6x32xf32>
    %147 = arith.mulf %146, %20 : vector<6x32xf32>
    %c4_i32 = arith.constant 4 : i32
    %148 = vector.broadcast %c4_i32 : i32 to vector<6x1xi32>
    %149 = arith.cmpi eq, %21, %148 : vector<6x1xi32>
    %150 = arith.extui %149 : vector<6x1xi1> to vector<6x1xi32>
    %151 = arith.sitofp %150 : vector<6x1xi32> to vector<6x1xf32>
    %152 = vector.broadcast %151 : vector<6x1xf32> to vector<6x32xf32>
    %153 = arith.mulf %152, %1 : vector<6x32xf32>
    %cst_46 = arith.constant 1.000000e+00 : f32
    %154 = vector.broadcast %cst_46 : f32 to vector<6x1xf32>
    %155 = arith.subf %154, %151 : vector<6x1xf32>
    %156 = vector.broadcast %155 : vector<6x1xf32> to vector<6x32xf32>
    %157 = arith.mulf %156, %147 : vector<6x32xf32>
    %158 = arith.addf %153, %157 : vector<6x32xf32>
    %c4 = arith.constant 4 : index
    %c0_47 = arith.constant 0 : index
    %c0_48 = arith.constant 0 : index
    %159 = vector.load %arg8[%c4, %c0_47, %c0_48] : memref<6x6x32xf32, #tpu.memory_space<vmem>>, vector<1x6x32xf32>
    %160 = vector.shape_cast %159 : vector<1x6x32xf32> to vector<6x32xf32>
    %161 = vector.shape_cast %158 : vector<6x32xf32> to vector<1x6x32xf32>
    tpu.vector_store %arg8[%c4, %c0_47, %c0_48], %161 {strides = array<i32>} : memref<6x6x32xf32, #tpu.memory_space<vmem>>, vector<1x6x32xf32>,
    %162 = vector.extract_strided_slice %12 {offsets = [5, 0], sizes = [1, 16], strides = [1, 1]} : vector<6x16xf32> to vector<1x16xf32>
    %163 = vector.broadcast %162 : vector<1x16xf32> to vector<6x16xf32>
    %164 = arith.addf %163, %19 : vector<6x16xf32>
    %cst_49 = arith.constant 0.000000e+00 : f32
    %165 = vector.broadcast %cst_49 : f32 to vector<6x16xf32>
    %166 = arith.maximumf %164, %165 : vector<6x16xf32>
    %cst_50 = arith.constant dense<0.000000e+00> : vector<6x32xf32>
    %167 = tpu.matmul %166, %6, %cst_50 {dimension_numbers = #tpu.dot_dimension_numbers<[1], [0], [0], [1], [0, 0, 1, 1], [], []>} : vector<6x16xf32>, vector<16x32xf32>, vector<6x32xf32> -> vector<6x32xf32>
    %168 = vector.broadcast %7 : vector<1x32xf32> to vector<6x32xf32>
    %169 = arith.addf %167, %168 : vector<6x32xf32>
    %170 = arith.negf %169 : vector<6x32xf32>
    %171 = math.exp %170 : vector<6x32xf32>
    %cst_51 = arith.constant 1.000000e+00 : f32
    %172 = vector.broadcast %cst_51 : f32 to vector<6x32xf32>
    %173 = arith.addf %172, %171 : vector<6x32xf32>
    %174 = arith.divf %172, %173 : vector<6x32xf32>
    %175 = arith.mulf %174, %20 : vector<6x32xf32>
    %c5_i32 = arith.constant 5 : i32
    %176 = vector.broadcast %c5_i32 : i32 to vector<6x1xi32>
    %177 = arith.cmpi eq, %21, %176 : vector<6x1xi32>
    %178 = arith.extui %177 : vector<6x1xi1> to vector<6x1xi32>
    %179 = arith.sitofp %178 : vector<6x1xi32> to vector<6x1xf32>
    %180 = vector.broadcast %179 : vector<6x1xf32> to vector<6x32xf32>
    %181 = arith.mulf %180, %1 : vector<6x32xf32>
    %cst_52 = arith.constant 1.000000e+00 : f32
    %182 = vector.broadcast %cst_52 : f32 to vector<6x1xf32>
    %183 = arith.subf %182, %179 : vector<6x1xf32>
    %184 = vector.broadcast %183 : vector<6x1xf32> to vector<6x32xf32>
    %185 = arith.mulf %184, %175 : vector<6x32xf32>
    %186 = arith.addf %181, %185 : vector<6x32xf32>
    %c5 = arith.constant 5 : index
    %c0_53 = arith.constant 0 : index
    %c0_54 = arith.constant 0 : index
    %187 = vector.load %arg8[%c5, %c0_53, %c0_54] : memref<6x6x32xf32, #tpu.memory_space<vmem>>, vector<1x6x32xf32>
    %188 = vector.shape_cast %187 : vector<1x6x32xf32> to vector<6x32xf32>
    %189 = vector.shape_cast %186 : vector<6x32xf32> to vector<1x6x32xf32>
    tpu.vector_store %arg8[%c5, %c0_53, %c0_54], %189 {strides = array<i32>} : memref<6x6x32xf32, #tpu.memory_space<vmem>>, vector<1x6x32xf32>,
    return
  }
}

</mosaic_0001>

<llo_original>
// kernel: interaction_gate.1
$region0: #{interaction_gate.1}
  #allocation0 [shape = 'u32[]', space=smem, size = 0x4, offset = 0x4, fixed_abs, tag = 'smem constant byte address 0x4 - core index']
  #allocation1 [shape = 'u32[144,128]{1,0:T(1,128)}', space=vmem, size = 0x12000, scoped, tag = 'internal scratch']
  %s0 = inlined_call_operand.vmem [shape: f32[6,32], index: 0, kind: input, shape index: {}]
  %s1 = inlined_call_operand.vmem [shape: f32[6,32], index: 1, kind: input, shape index: {}]
  %s2 = inlined_call_operand.vmem [shape: f32[6,2], index: 2, kind: input, shape index: {}]
  %s3 = inlined_call_operand.vmem [shape: f32[6,2], index: 3, kind: input, shape index: {}]
  %s4 = inlined_call_operand.hbm [shape: f32[8,16], index: 4, kind: input, shape index: {}]
  %s5 = inlined_call_operand.hbm [shape: f32[1,16], index: 5, kind: input, shape index: {}]
  %s6 = inlined_call_operand.vmem [shape: f32[16,32], index: 6, kind: input, shape index: {}]
  %s7 = inlined_call_operand.hbm [shape: f32[1,32], index: 7, kind: input, shape index: {}]
  %s8 = inlined_call_operand.hbm [shape: f32[6,6,32], index: 8, kind: output, shape index: {}]
  %s9 = sld [smem:[#allocation0]]
  $region54: #{interaction_gate.1} parent=0
    _
  %s11 = ssub.s32 1, %s9
  %s12 = scalar_select 0, %s11, %s9
  $region1: #{interaction_gate.1} parent=0
    #allocation2 [shape = 'u8[4096]{0}', space=vmem, size = 0x1000, scoped, tag = 'input window, operand 4, single buffered']
    #allocation3 [shape = 's32[1]{0}', space=sflag, size = 0x4, scoped, tag = 'scoped memory for interaction_gate.1']
    #allocation4 [shape = 's32[1]{0}', space=sflag, size = 0x4, scoped, tag = 'scoped memory for interaction_gate.1']
    #allocation5 [shape = 'u8[512]{0}', space=vmem, size = 0x400, scoped, tag = 'input window, operand 5, single buffered']
    #allocation6 [shape = 's32[1]{0}', space=sflag, size = 0x4, scoped, tag = 'scoped memory for interaction_gate.1']
    #allocation7 [shape = 'u8[512]{0}', space=vmem, size = 0x400, scoped, tag = 'input window, operand 7, single buffered']
    #allocation8 [shape = 'u8[24576]{0}', space=vmem, size = 0x6000, scoped, tag = 'output window, operand 0, single buffered']
    %13 = vsyncpa [#allocation3], 0
    %14 = vsyncpa [#allocation6], 0
    %15 = vsyncpa [#allocation4], 0
    // Predicated region
    $region2: #{interaction_gate.1} parent=1 // pred_check
      _
    $region3: #{interaction_gate.1} parent=1 // pred_check_branch
      %17 = sbr.rel (0) target = $region5
    $region4: #{interaction_gate.1} parent=1 // pred_region
      _
    $region5: #{interaction_gate.1} parent=1 // pred_fallthru
      _
    // Predicated region
    $region6: #{interaction_gate.1} parent=1 // pred_check
      _
    $region7: #{interaction_gate.1} parent=1 // pred_check_branch
      %19 = sbr.rel (0) target = $region9
    $region8: #{interaction_gate.1} parent=1 // pred_region
      _
    $region9: #{interaction_gate.1} parent=1 // pred_fallthru
      _
    // Predicated region
    $region10: #{interaction_gate.1} parent=1 // pred_check
      _
    $region11: #{interaction_gate.1} parent=1 // pred_check_branch
      %21 = sbr.rel (0) target = $region13
    $region12: #{interaction_gate.1} parent=1 // pred_region
      _
    $region13: #{interaction_gate.1} parent=1 // pred_fallthru
      _
    // Predicated region
    $region14: #{interaction_gate.1} parent=1 // pred_check
      _
    $region15: #{interaction_gate.1} parent=1 // pred_check_branch
      %23 = sbr.rel (0) target = $region17
    $region16: #{interaction_gate.1} parent=1 // pred_region
      _
    $region17: #{interaction_gate.1} parent=1 // pred_fallthru
      _
    // Predicated region
    $region18: #{interaction_gate.1} parent=1 // pred_check
      _
    $region19: #{interaction_gate.1} parent=1 // pred_check_branch
      %25 = sbr.rel (0) target = $region21
    $region20: #{interaction_gate.1} parent=1 // pred_region
      %s27 = ssub.s32 128, 128
      %28 = vsyncadd [#allocation3], %s27
      %s30 = sshll.u32 [#allocation2], 4
      %s31 = int_to_ptr.vmem [resolvable:$true] %s30
      %33 = dma.hbm_to_vmem [thread:$0]  %s4, 128, %s31, [#allocation3]
    $region21: #{interaction_gate.1} parent=1 // pred_fallthru
      _
    // Predicated region
    $region22: #{interaction_gate.1} parent=1 // pred_check
      _
    $region23: #{interaction_gate.1} parent=1 // pred_check_branch
      %35 = sbr.rel (0) target = $region25
    $region24: #{interaction_gate.1} parent=1 // pred_region
      %s37 = ssub.s32 16, 16
      %38 = vsyncadd [#allocation6], %s37
      %s40 = sshll.u32 [#allocation5], 4
      %s41 = int_to_ptr.vmem [resolvable:$true] %s40
      %43 = dma.hbm_to_vmem [thread:$0]  %s5, 16, %s41, [#allocation6]
    $region25: #{interaction_gate.1} parent=1 // pred_fallthru
      _
    // Predicated region
    $region26: #{interaction_gate.1} parent=1 // pred_check
      _
    $region27: #{interaction_gate.1} parent=1 // pred_check_branch
      %45 = sbr.rel (0) target = $region29
    $region28: #{interaction_gate.1} parent=1 // pred_region
      _
    $region29: #{interaction_gate.1} parent=1 // pred_fallthru
      _
    // Predicated region
    $region30: #{interaction_gate.1} parent=1 // pred_check
      _
    $region31: #{interaction_gate.1} parent=1 // pred_check_branch
      %47 = sbr.rel (0) target = $region33
    $region32: #{interaction_gate.1} parent=1 // pred_region
      %s49 = ssub.s32 16, 16
      %50 = vsyncadd [#allocation6], %s49
      %s52 = sshll.u32 [#allocation7], 4
      %s53 = int_to_ptr.vmem [resolvable:$true] %s52
      %55 = dma.hbm_to_vmem [thread:$0]  %s7, 16, %s53, [#allocation6]
    $region33: #{interaction_gate.1} parent=1 // pred_fallthru
      _
    // Predicated region
    $region34: #{interaction_gate.1} parent=1 // pred_check
      _
    $region35: #{interaction_gate.1} parent=1 // pred_check_branch
      %57 = sbr.rel (0) target = $region37
    $region36: #{interaction_gate.1} parent=1 // pred_region
      %58 = dma.done [#allocation3], 128
    $region37: #{interaction_gate.1} parent=1 // pred_fallthru
      _
    // Predicated region
    $region38: #{interaction_gate.1} parent=1 // pred_check
      _
    $region39: #{interaction_gate.1} parent=1 // pred_check_branch
      %60 = sbr.rel (0) target = $region41
    $region40: #{interaction_gate.1} parent=1 // pred_region
      %61 = dma.done [#allocation6], 16
    $region41: #{interaction_gate.1} parent=1 // pred_fallthru
      _
    // Predicated region
    $region42: #{interaction_gate.1} parent=1 // pred_check
      _
    $region43: #{interaction_gate.1} parent=1 // pred_check_branch
      %63 = sbr.rel (0) target = $region45
    $region44: #{interaction_gate.1} parent=1 // pred_region
      %64 = dma.done [#allocation6], 16
    $region45: #{interaction_gate.1} parent=1 // pred_fallthru
      _
    %v65 = vld [vmem:[%s0] sm:$0x3f]
    %v66 = vld [vmem:[%s1] sm:$0x3f]
    %v67 = vld [vmem:[%s2] sm:$0x3f]
    %v68 = vld [vmem:[%s3] sm:$0x3f]
    %v69 = vld [vmem:[#allocation2] sm:$0xff]
    %v70 = vld [vmem:[#allocation5] sm:$0x1]
    %v71 = vld [vmem:[%s6] sm:$0xff]
    %v72 = vld [vmem:[%s6 + $0x8] sm:$0xff]
    %v73 = vld [vmem:[#allocation7] sm:$0x1]
    %v75 = vrot.slane %v69, 2
    %vm76 = vcmask 15360
    %v78 = vsel %vm76, %v67, 0
    %vm80 = vcmask 1041408
    %v81 = vsel %vm80, %v75, 0
    %83 = vmatprep.subr.mxu0 0.0
    %84 = vmatpush1.msra.mxu0 0.0
    %85 = vmatprep.subr.mxu0 0.0
    %86 = vmatpush1.msra.mxu0 0.0
    %87 = vmatprep.subr.mxu0 0.0
    %88 = vmatpush1.msra.mxu0 0.0
    %89 = vmatprep.subr.mxu0 0.0
    %90 = vmatpush1.msra.mxu0 0.0
    %91 = vmatprep.subr.mxu0 0.0
    %92 = vmatpush1.msra.mxu0 0.0
    %93 = vmatprep.subr.mxu0 0.0
    %94 = vmatpush1.msra.mxu0 0.0
    %95 = vmatprep.subr.mxu0 0.0
    %96 = vmatpush1.msra.mxu0 0.0
    %97 = vmatprep.subr.mxu0 0.0
    %98 = vmatpush1.msra.mxu0 0.0
    %99 = vmatprep.subr.mxu0 0.0
    %100 = vmatpush1.msra.mxu0 0.0
    %101 = vmatprep.subr.mxu0 0.0
    %102 = vmatpush1.msra.mxu0 0.0
    %103 = vmatprep.subr.mxu0 0.0
    %104 = vmatpush1.msra.mxu0 0.0
    %105 = vmatprep.subr.mxu0 0.0
    %106 = vmatpush1.msra.mxu0 0.0
    %107 = vmatprep.subr.mxu0 0.0
    %108 = vmatpush1.msra.mxu0 0.0
    %109 = vmatprep.subr.mxu0 0.0
    %110 = vmatpush1.msra.mxu0 0.0
    %111 = vmatprep.subr.mxu0 0.0
    %112 = vmatpush1.msra.mxu0 0.0
    %113 = vmatprep.subr.mxu0 0.0
    %114 = vmatpush1.msra.mxu0 %v81
    %115 = vmatprep.subr.mxu0 0.0
    %116 = vmatpush2.msra.mxu0 0.0
    %117 = vmatprep.subr.mxu0 0.0
    %118 = vmatpush2.msra.mxu0 0.0
    %119 = vmatprep.subr.mxu0 0.0
    %120 = vmatpush2.msra.mxu0 0.0
    %121 = vmatprep.subr.mxu0 0.0
    %122 = vmatpush2.msra.mxu0 0.0
    %123 = vmatprep.subr.mxu0 0.0
    %124 = vmatpush2.msra.mxu0 0.0
    %125 = vmatprep.subr.mxu0 0.0
    %126 = vmatpush2.msra.mxu0 0.0
    %127 = vmatprep.subr.mxu0 0.0
    %128 = vmatpush2.msra.mxu0 0.0
    %129 = vmatprep.subr.mxu0 0.0
    %130 = vmatpush2.msra.mxu0 0.0
    %131 = vmatprep.subr.mxu0 0.0
    %132 = vmatpush2.msra.mxu0 0.0
    %133 = vmatprep.subr.mxu0 0.0
    %134 = vmatpush2.msra.mxu0 0.0
    %135 = vmatprep.subr.mxu0 0.0
    %136 = vmatpush2.msra.mxu0 0.0
    %137 = vmatprep.subr.mxu0 0.0
    %138 = vmatpush2.msra.mxu0 0.0
    %139 = vmatprep.subr.mxu0 0.0
    %140 = vmatpush2.msra.mxu0 0.0
    %141 = vmatprep.subr.mxu0 0.0
    %142 = vmatpush2.msra.mxu0 0.0
    %143 = vmatprep.subr.mxu0 0.0
    %144 = vmatpush2.msra.mxu0 0.0
    %145 = vmatprep.subr.mxu0 0.0
    %146 = vmatpush2.msra.mxu0 0.0
    %147 = vmatprep.mubr.f32.mxu0 0.0
    %148 = vmatmul.mubr.f32.gmra.mxu0 %v78
    %v149 = vpop.f32.mrf.mxu0
    %v150 = vadd.f32 0.0, %v149
    %v151 = vpop.f32.mrf.mxu0
    %152 = vdwg.mxu0
    %v154 = vsel %vm76, %v68, 0
    %v156 = vsel %vm80, %v69, 0
    %158 = vmatprep.subr.mxu0 0.0
    %159 = vmatpush1.msra.mxu0 0.0
    %160 = vmatprep.subr.mxu0 0.0
    %161 = vmatpush1.msra.mxu0 0.0
    %162 = vmatprep.subr.mxu0 0.0
    %163 = vmatpush1.msra.mxu0 0.0
    %164 = vmatprep.subr.mxu0 0.0
    %165 = vmatpush1.msra.mxu0 0.0
    %166 = vmatprep.subr.mxu0 0.0
    %167 = vmatpush1.msra.mxu0 0.0
    %168 = vmatprep.subr.mxu0 0.0
    %169 = vmatpush1.msra.mxu0 0.0
    %170 = vmatprep.subr.mxu0 0.0
    %171 = vmatpush1.msra.mxu0 0.0
    %172 = vmatprep.subr.mxu0 0.0
    %173 = vmatpush1.msra.mxu0 0.0
    %174 = vmatprep.subr.mxu0 0.0
    %175 = vmatpush1.msra.mxu0 0.0
    %176 = vmatprep.subr.mxu0 0.0
    %177 = vmatpush1.msra.mxu0 0.0
    %178 = vmatprep.subr.mxu0 0.0
    %179 = vmatpush1.msra.mxu0 0.0
    %180 = vmatprep.subr.mxu0 0.0
    %181 = vmatpush1.msra.mxu0 0.0
    %182 = vmatprep.subr.mxu0 0.0
    %183 = vmatpush1.msra.mxu0 0.0
    %184 = vmatprep.subr.mxu0 0.0
    %185 = vmatpush1.msra.mxu0 0.0
    %186 = vmatprep.subr.mxu0 0.0
    %187 = vmatpush1.msra.mxu0 0.0
    %188 = vmatprep.subr.mxu0 0.0
    %189 = vmatpush1.msra.mxu0 %v156
    %190 = vmatprep.subr.mxu0 0.0
    %191 = vmatpush2.msra.mxu0 0.0
    %192 = vmatprep.subr.mxu0 0.0
    %193 = vmatpush2.msra.mxu0 0.0
    %194 = vmatprep.subr.mxu0 0.0
    %195 = vmatpush2.msra.mxu0 0.0
    %196 = vmatprep.subr.mxu0 0.0
    %197 = vmatpush2.msra.mxu0 0.0
    %198 = vmatprep.subr.mxu0 0.0
    %199 = vmatpush2.msra.mxu0 0.0
    %200 = vmatprep.subr.mxu0 0.0
    %201 = vmatpush2.msra.mxu0 0.0
    %202 = vmatprep.subr.mxu0 0.0
    %203 = vmatpush2.msra.mxu0 0.0
    %204 = vmatprep.subr.mxu0 0.0
    %205 = vmatpush2.msra.mxu0 0.0
    %206 = vmatprep.subr.mxu0 0.0
    %207 = vmatpush2.msra.mxu0 0.0
    %208 = vmatprep.subr.mxu0 0.0
    %209 = vmatpush2.msra.mxu0 0.0
    %210 = vmatprep.subr.mxu0 0.0
    %211 = vmatpush2.msra.mxu0 0.0
    %212 = vmatprep.subr.mxu0 0.0
    %213 = vmatpush2.msra.mxu0 0.0
    %214 = vmatprep.subr.mxu0 0.0
    %215 = vmatpush2.msra.mxu0 0.0
    %216 = vmatprep.subr.mxu0 0.0
    %217 = vmatpush2.msra.mxu0 0.0
    %218 = vmatprep.subr.mxu0 0.0
    %219 = vmatpush2.msra.mxu0 0.0
    %220 = vmatprep.subr.mxu0 0.0
    %221 = vmatpush2.msra.mxu0 0.0
    %222 = vmatprep.mubr.f32.mxu0 0.0
    %223 = vmatmul.mubr.f32.gmra.mxu0 %v154
    %v224 = vpop.f32.mrf.mxu0
    %v225 = vadd.f32 %v150, %v224
    %v226 = vpop.f32.mrf.mxu0
    %227 = vdwg.mxu0
    %v228 = vrot.slane %v69, 6
    %v229 = vsel %vm80, %v228, 0
    %231 = vmatprep.subr.mxu0 0.0
    %232 = vmatpush1.msra.mxu0 0.0
    %233 = vmatprep.subr.mxu0 0.0
    %234 = vmatpush1.msra.mxu0 0.0
    %235 = vmatprep.subr.mxu0 0.0
    %236 = vmatpush1.msra.mxu0 0.0
    %237 = vmatprep.subr.mxu0 0.0
    %238 = vmatpush1.msra.mxu0 0.0
    %239 = vmatprep.subr.mxu0 0.0
    %240 = vmatpush1.msra.mxu0 0.0
    %241 = vmatprep.subr.mxu0 0.0
    %242 = vmatpush1.msra.mxu0 0.0
    %243 = vmatprep.subr.mxu0 0.0
    %244 = vmatpush1.msra.mxu0 0.0
    %245 = vmatprep.subr.mxu0 0.0
    %246 = vmatpush1.msra.mxu0 0.0
    %247 = vmatprep.subr.mxu0 0.0
    %248 = vmatpush1.msra.mxu0 0.0
    %249 = vmatprep.subr.mxu0 0.0
    %250 = vmatpush1.msra.mxu0 0.0
    %251 = vmatprep.subr.mxu0 0.0
    %252 = vmatpush1.msra.mxu0 0.0
    %253 = vmatprep.subr.mxu0 0.0
    %254 = vmatpush1.msra.mxu0 0.0
    %255 = vmatprep.subr.mxu0 0.0
    %256 = vmatpush1.msra.mxu0 0.0
    %257 = vmatprep.subr.mxu0 0.0
    %258 = vmatpush1.msra.mxu0 0.0
    %259 = vmatprep.subr.mxu0 0.0
    %260 = vmatpush1.msra.mxu0 0.0
    %261 = vmatprep.subr.mxu0 0.0
    %262 = vmatpush1.msra.mxu0 %v229
    %263 = vmatprep.subr.mxu0 0.0
    %264 = vmatpush2.msra.mxu0 0.0
    %265 = vmatprep.subr.mxu0 0.0
    %266 = vmatpush2.msra.mxu0 0.0
    %267 = vmatprep.subr.mxu0 0.0
    %268 = vmatpush2.msra.mxu0 0.0
    %269 = vmatprep.subr.mxu0 0.0
    %270 = vmatpush2.msra.mxu0 0.0
    %271 = vmatprep.subr.mxu0 0.0
    %272 = vmatpush2.msra.mxu0 0.0
    %273 = vmatprep.subr.mxu0 0.0
    %274 = vmatpush2.msra.mxu0 0.0
    %275 = vmatprep.subr.mxu0 0.0
    %276 = vmatpush2.msra.mxu0 0.0
    %277 = vmatprep.subr.mxu0 0.0
    %278 = vmatpush2.msra.mxu0 0.0
    %279 = vmatprep.subr.mxu0 0.0
    %280 = vmatpush2.msra.mxu0 0.0
    %281 = vmatprep.subr.mxu0 0.0
    %282 = vmatpush2.msra.mxu0 0.0
    %283 = vmatprep.subr.mxu0 0.0
    %284 = vmatpush2.msra.mxu0 0.0
    %285 = vmatprep.subr.mxu0 0.0
    %286 = vmatpush2.msra.mxu0 0.0
    %287 = vmatprep.subr.mxu0 0.0
    %288 = vmatpush2.msra.mxu0 0.0
    %289 = vmatprep.subr.mxu0 0.0
    %290 = vmatpush2.msra.mxu0 0.0
    %291 = vmatprep.subr.mxu0 0.0
    %292 = vmatpush2.msra.mxu0 0.0
    %293 = vmatprep.subr.mxu0 0.0
    %294 = vmatpush2.msra.mxu0 0.0
    %295 = vmatprep.mubr.f32.mxu0 0.0
    %296 = vmatmul.mubr.f32.gmra.mxu0 %v78
    %v297 = vpop.f32.mrf.mxu0
    %v298 = vadd.f32 0.0, %v297
    %v299 = vpop.f32.mrf.mxu0
    %300 = vdwg.mxu0
    %v301 = vrot.slane %v69, 4
    %v302 = vsel %vm80, %v301, 0
    %304 = vmatprep.subr.mxu0 0.0
    %305 = vmatpush1.msra.mxu0 0.0
    %306 = vmatprep.subr.mxu0 0.0
    %307 = vmatpush1.msra.mxu0 0.0
    %308 = vmatprep.subr.mxu0 0.0
    %309 = vmatpush1.msra.mxu0 0.0
    %310 = vmatprep.subr.mxu0 0.0
    %311 = vmatpush1.msra.mxu0 0.0
    %312 = vmatprep.subr.mxu0 0.0
    %313 = vmatpush1.msra.mxu0 0.0
    %314 = vmatprep.subr.mxu0 0.0
    %315 = vmatpush1.msra.mxu0 0.0
    %316 = vmatprep.subr.mxu0 0.0
    %317 = vmatpush1.msra.mxu0 0.0
    %318 = vmatprep.subr.mxu0 0.0
    %319 = vmatpush1.msra.mxu0 0.0
    %320 = vmatprep.subr.mxu0 0.0
    %321 = vmatpush1.msra.mxu0 0.0
    %322 = vmatprep.subr.mxu0 0.0
    %323 = vmatpush1.msra.mxu0 0.0
    %324 = vmatprep.subr.mxu0 0.0
    %325 = vmatpush1.msra.mxu0 0.0
    %326 = vmatprep.subr.mxu0 0.0
    %327 = vmatpush1.msra.mxu0 0.0
    %328 = vmatprep.subr.mxu0 0.0
    %329 = vmatpush1.msra.mxu0 0.0
    %330 = vmatprep.subr.mxu0 0.0
    %331 = vmatpush1.msra.mxu0 0.0
    %332 = vmatprep.subr.mxu0 0.0
    %333 = vmatpush1.msra.mxu0 0.0
    %334 = vmatprep.subr.mxu0 0.0
    %335 = vmatpush1.msra.mxu0 %v302
    %336 = vmatprep.subr.mxu0 0.0
    %337 = vmatpush2.msra.mxu0 0.0
    %338 = vmatprep.subr.mxu0 0.0
    %339 = vmatpush2.msra.mxu0 0.0
    %340 = vmatprep.subr.mxu0 0.0
    %341 = vmatpush2.msra.mxu0 0.0
    %342 = vmatprep.subr.mxu0 0.0
    %343 = vmatpush2.msra.mxu0 0.0
    %344 = vmatprep.subr.mxu0 0.0
    %345 = vmatpush2.msra.mxu0 0.0
    %346 = vmatprep.subr.mxu0 0.0
    %347 = vmatpush2.msra.mxu0 0.0
    %348 = vmatprep.subr.mxu0 0.0
    %349 = vmatpush2.msra.mxu0 0.0
    %350 = vmatprep.subr.mxu0 0.0
    %351 = vmatpush2.msra.mxu0 0.0
    %352 = vmatprep.subr.mxu0 0.0
    %353 = vmatpush2.msra.mxu0 0.0
    %354 = vmatprep.subr.mxu0 0.0
    %355 = vmatpush2.msra.mxu0 0.0
    %356 = vmatprep.subr.mxu0 0.0
    %357 = vmatpush2.msra.mxu0 0.0
    %358 = vmatprep.subr.mxu0 0.0
    %359 = vmatpush2.msra.mxu0 0.0
    %360 = vmatprep.subr.mxu0 0.0
    %361 = vmatpush2.msra.mxu0 0.0
    %362 = vmatprep.subr.mxu0 0.0
    %363 = vmatpush2.msra.mxu0 0.0
    %364 = vmatprep.subr.mxu0 0.0
    %365 = vmatpush2.msra.mxu0 0.0
    %366 = vmatprep.subr.mxu0 0.0
    %367 = vmatpush2.msra.mxu0 0.0
    %368 = vmatprep.mubr.f32.mxu0 0.0
    %369 = vmatmul.mubr.f32.gmra.mxu0 %v154
    %v370 = vpop.f32.mrf.mxu0
    %v371 = vadd.f32 %v298, %v370
    %v372 = vpop.f32.mrf.mxu0
    %373 = vdwg.mxu0
    %v375 = vlaneseq
    %v376 = vshrl.u32 %v375, 7
    %v377 = vsub.s32 0, %v376
    %v378 = vrot.slane %v70, %v377
    %v380 = vadd.f32 %v371, %v378
    %v381 = vtanh.pop %v65
    %v382 = vlaneseq
    %v383 = vshrl.u32 %v382, 7
    %v384 = vlaneseq
    %v385 = vshrl.u32 %v384, 7
    %v386 = vsub.s32 0, %v385
    %v387 = vrot.slane %v225, %v386
    %v388 = vadd.f32 %v387, %v380
    %v389 = vmax.f32 %v388, 0.0
    %v391 = vlaneseq
    %v392 = vshrl.u32 %v391, 7
    %v393 = vsub.s32 0, %v392
    %v394 = vrot.slane %v73, %v393
    %vm396 = vcmask 130048
    %v398 = vsel %vm396, %v389, 0
    %400 = vmatprep.subr.mxu0 0.0
    %401 = vmatpush1.msra.mxu0 0.0
    %402 = vmatprep.subr.mxu0 0.0
    %403 = vmatpush1.msra.mxu0 0.0
    %404 = vmatprep.subr.mxu0 0.0
    %405 = vmatpush1.msra.mxu0 0.0
    %406 = vmatprep.subr.mxu0 0.0
    %407 = vmatpush1.msra.mxu0 0.0
    %408 = vmatprep.subr.mxu0 0.0
    %409 = vmatpush1.msra.mxu0 0.0
    %410 = vmatprep.subr.mxu0 0.0
    %411 = vmatpush1.msra.mxu0 0.0
    %412 = vmatprep.subr.mxu0 0.0
    %413 = vmatpush1.msra.mxu0 0.0
    %414 = vmatprep.subr.mxu0 0.0
    %415 = vmatpush1.msra.mxu0 0.0
    %416 = vmatprep.subr.mxu0 0.0
    %417 = vmatpush1.msra.mxu0 0.0
    %418 = vmatprep.subr.mxu0 0.0
    %419 = vmatpush1.msra.mxu0 0.0
    %420 = vmatprep.subr.mxu0 0.0
    %421 = vmatpush1.msra.mxu0 0.0
    %422 = vmatprep.subr.mxu0 0.0
    %423 = vmatpush1.msra.mxu0 0.0
    %424 = vmatprep.subr.mxu0 0.0
    %425 = vmatpush1.msra.mxu0 0.0
    %426 = vmatprep.subr.mxu0 0.0
    %427 = vmatpush1.msra.mxu0 0.0
    %428 = vmatprep.subr.mxu0 0.0
    %429 = vmatpush1.msra.mxu0 %v72
    %430 = vmatprep.subr.mxu0 0.0
    %431 = vmatpush1.msra.mxu0 %v71
    %432 = vmatprep.subr.mxu0 0.0
    %433 = vmatpush2.msra.mxu0 0.0
    %434 = vmatprep.subr.mxu0 0.0
    %435 = vmatpush2.msra.mxu0 0.0
    %436 = vmatprep.subr.mxu0 0.0
    %437 = vmatpush2.msra.mxu0 0.0
    %438 = vmatprep.subr.mxu0 0.0
    %439 = vmatpush2.msra.mxu0 0.0
    %440 = vmatprep.subr.mxu0 0.0
    %441 = vmatpush2.msra.mxu0 0.0
    %442 = vmatprep.subr.mxu0 0.0
    %443 = vmatpush2.msra.mxu0 0.0
    %444 = vmatprep.subr.mxu0 0.0
    %445 = vmatpush2.msra.mxu0 0.0
    %446 = vmatprep.subr.mxu0 0.0
    %447 = vmatpush2.msra.mxu0 0.0
    %448 = vmatprep.subr.mxu0 0.0
    %449 = vmatpush2.msra.mxu0 0.0
    %450 = vmatprep.subr.mxu0 0.0
    %451 = vmatpush2.msra.mxu0 0.0
    %452 = vmatprep.subr.mxu0 0.0
    %453 = vmatpush2.msra.mxu0 0.0
    %454 = vmatprep.subr.mxu0 0.0
    %455 = vmatpush2.msra.mxu0 0.0
    %456 = vmatprep.subr.mxu0 0.0
    %457 = vmatpush2.msra.mxu0 0.0
    %458 = vmatprep.subr.mxu0 0.0
    %459 = vmatpush2.msra.mxu0 0.0
    %460 = vmatprep.subr.mxu0 0.0
    %461 = vmatpush2.msra.mxu0 0.0
    %462 = vmatprep.subr.mxu0 0.0
    %463 = vmatpush2.msra.mxu0 0.0
    %464 = vmatprep.mubr.f32.mxu0 0.0
    %465 = vmatmul.mubr.f32.gmra.mxu0 %v398
    %v466 = vpop.f32.mrf.mxu0
    %v467 = vadd.f32 %v394, %v466
    %v468 = vpop.f32.mrf.mxu0
    %469 = vdwg.mxu0
    %v470 = vxor.u32 %v467, 2147483648
    %v471 = vmul.f32 %v470, 1.442695
    %v472 = vpow.pop %v471
    %v473 = vadd.f32 %v472, 1.0
    %v474 = vrcp.pop %v473
    %v475 = vmul.f32 1.0, %v474
    %v476 = vmul.f32 %v475, %v381
    %vm477 = vcmp.eq.s32.totalorder %v383, 0
    %v478 = vsel %vm477, 1, 0
    %v479 = vcvt.s32.f32 %v478
    %v480 = vmul.f32 %v479, %v66
    %v481 = vsub.f32 1.0, %v479
    %v482 = vmul.f32 %v481, %v476
    %v483 = vadd.f32 %v480, %v482
    %vm484 = vcmask 259072
    %485 = vst.msk [vmem:[#allocation8] sm:$0x3f] %vm484, %v483
    %v486 = vlaneseq
    %v487 = vshrl.u32 %v486, 7
    %v488 = vsub.s32 1, %v487
    %v489 = vrot.slane %v225, %v488
    %v490 = vadd.f32 %v489, %v380
    %v491 = vmax.f32 %v490, 0.0
    %v493 = vsel %vm396, %v491, 0
    %495 = vmatprep.subr.mxu0 0.0
    %496 = vmatpush1.msra.mxu0 0.0
    %497 = vmatprep.subr.mxu0 0.0
    %498 = vmatpush1.msra.mxu0 0.0
    %499 = vmatprep.subr.mxu0 0.0
    %500 = vmatpush1.msra.mxu0 0.0
    %501 = vmatprep.subr.mxu0 0.0
    %502 = vmatpush1.msra.mxu0 0.0
    %503 = vmatprep.subr.mxu0 0.0
    %504 = vmatpush1.msra.mxu0 0.0
    %505 = vmatprep.subr.mxu0 0.0
    %506 = vmatpush1.msra.mxu0 0.0
    %507 = vmatprep.subr.mxu0 0.0
    %508 = vmatpush1.msra.mxu0 0.0
    %509 = vmatprep.subr.mxu0 0.0
    %510 = vmatpush1.msra.mxu0 0.0
    %511 = vmatprep.subr.mxu0 0.0
    %512 = vmatpush1.msra.mxu0 0.0
    %513 = vmatprep.subr.mxu0 0.0
    %514 = vmatpush1.msra.mxu0 0.0
    %515 = vmatprep.subr.mxu0 0.0
    %516 = vmatpush1.msra.mxu0 0.0
    %517 = vmatprep.subr.mxu0 0.0
    %518 = vmatpush1.msra.mxu0 0.0
    %519 = vmatprep.subr.mxu0 0.0
    %520 = vmatpush1.msra.mxu0 0.0
    %521 = vmatprep.subr.mxu0 0.0
    %522 = vmatpush1.msra.mxu0 0.0
    %523 = vmatprep.subr.mxu0 0.0
    %524 = vmatpush1.msra.mxu0 %v72
    %525 = vmatprep.subr.mxu0 0.0
    %526 = vmatpush1.msra.mxu0 %v71
    %527 = vmatprep.subr.mxu0 0.0
    %528 = vmatpush2.msra.mxu0 0.0
    %529 = vmatprep.subr.mxu0 0.0
    %530 = vmatpush2.msra.mxu0 0.0
    %531 = vmatprep.subr.mxu0 0.0
    %532 = vmatpush2.msra.mxu0 0.0
    %533 = vmatprep.subr.mxu0 0.0
    %534 = vmatpush2.msra.mxu0 0.0
    %535 = vmatprep.subr.mxu0 0.0
    %536 = vmatpush2.msra.mxu0 0.0
    %537 = vmatprep.subr.mxu0 0.0
    %538 = vmatpush2.msra.mxu0 0.0
    %539 = vmatprep.subr.mxu0 0.0
    %540 = vmatpush2.msra.mxu0 0.0
    %541 = vmatprep.subr.mxu0 0.0
    %542 = vmatpush2.msra.mxu0 0.0
    %543 = vmatprep.subr.mxu0 0.0
    %544 = vmatpush2.msra.mxu0 0.0
    %545 = vmatprep.subr.mxu0 0.0
    %546 = vmatpush2.msra.mxu0 0.0
    %547 = vmatprep.subr.mxu0 0.0
    %548 = vmatpush2.msra.mxu0 0.0
    %549 = vmatprep.subr.mxu0 0.0
    %550 = vmatpush2.msra.mxu0 0.0
    %551 = vmatprep.subr.mxu0 0.0
    %552 = vmatpush2.msra.mxu0 0.0
    %553 = vmatprep.subr.mxu0 0.0
    %554 = vmatpush2.msra.mxu0 0.0
    %555 = vmatprep.subr.mxu0 0.0
    %556 = vmatpush2.msra.mxu0 0.0
    %557 = vmatprep.subr.mxu0 0.0
    %558 = vmatpush2.msra.mxu0 0.0
    %559 = vmatprep.mubr.f32.mxu0 0.0
    %560 = vmatmul.mubr.f32.gmra.mxu0 %v493
    %v561 = vpop.f32.mrf.mxu0
    %v562 = vadd.f32 %v394, %v561
    %v563 = vpop.f32.mrf.mxu0
    %564 = vdwg.mxu0
    %v565 = vxor.u32 %v562, 2147483648
    %v566 = vmul.f32 %v565, 1.442695
    %v567 = vpow.pop %v566
    %v568 = vadd.f32 %v567, 1.0
    %v569 = vrcp.pop %v568
    %v570 = vmul.f32 1.0, %v569
    %v571 = vmul.f32 %v570, %v381
    %vm572 = vcmp.eq.s32.totalorder %v383, 1
    %v573 = vsel %vm572, 1, 0
    %v574 = vcvt.s32.f32 %v573
    %v575 = vmul.f32 %v574, %v66
    %v576 = vsub.f32 1.0, %v574
    %v577 = vmul.f32 %v576, %v571
    %v578 = vadd.f32 %v575, %v577
    %s579 = scalar_lea.vmem [#allocation8], 8
    %580 = vst.msk [vmem:[%s579] sm:$0x3f] %vm484, %v578
    %v581 = vlaneseq
    %v582 = vshrl.u32 %v581, 7
    %v583 = vsub.s32 2, %v582
    %v584 = vrot.slane %v225, %v583
    %v585 = vadd.f32 %v584, %v380
    %v586 = vmax.f32 %v585, 0.0
    %v588 = vsel %vm396, %v586, 0
    %590 = vmatprep.subr.mxu0 0.0
    %591 = vmatpush1.msra.mxu0 0.0
    %592 = vmatprep.subr.mxu0 0.0
    %593 = vmatpush1.msra.mxu0 0.0
    %594 = vmatprep.subr.mxu0 0.0
    %595 = vmatpush1.msra.mxu0 0.0
    %596 = vmatprep.subr.mxu0 0.0
    %597 = vmatpush1.msra.mxu0 0.0
    %598 = vmatprep.subr.mxu0 0.0
    %599 = vmatpush1.msra.mxu0 0.0
    %600 = vmatprep.subr.mxu0 0.0
    %601 = vmatpush1.msra.mxu0 0.0
    %602 = vmatprep.subr.mxu0 0.0
    %603 = vmatpush1.msra.mxu0 0.0
    %604 = vmatprep.subr.mxu0 0.0
    %605 = vmatpush1.msra.mxu0 0.0
    %606 = vmatprep.subr.mxu0 0.0
    %607 = vmatpush1.msra.mxu0 0.0
    %608 = vmatprep.subr.mxu0 0.0
    %609 = vmatpush1.msra.mxu0 0.0
    %610 = vmatprep.subr.mxu0 0.0
    %611 = vmatpush1.msra.mxu0 0.0
    %612 = vmatprep.subr.mxu0 0.0
    %613 = vmatpush1.msra.mxu0 0.0
    %614 = vmatprep.subr.mxu0 0.0
    %615 = vmatpush1.msra.mxu0 0.0
    %616 = vmatprep.subr.mxu0 0.0
    %617 = vmatpush1.msra.mxu0 0.0
    %618 = vmatprep.subr.mxu0 0.0
    %619 = vmatpush1.msra.mxu0 %v72
    %620 = vmatprep.subr.mxu0 0.0
    %621 = vmatpush1.msra.mxu0 %v71
    %622 = vmatprep.subr.mxu0 0.0
    %623 = vmatpush2.msra.mxu0 0.0
    %624 = vmatprep.subr.mxu0 0.0
    %625 = vmatpush2.msra.mxu0 0.0
    %626 = vmatprep.subr.mxu0 0.0
    %627 = vmatpush2.msra.mxu0 0.0
    %628 = vmatprep.subr.mxu0 0.0
    %629 = vmatpush2.msra.mxu0 0.0
    %630 = vmatprep.subr.mxu0 0.0
    %631 = vmatpush2.msra.mxu0 0.0
    %632 = vmatprep.subr.mxu0 0.0
    %633 = vmatpush2.msra.mxu0 0.0
    %634 = vmatprep.subr.mxu0 0.0
    %635 = vmatpush2.msra.mxu0 0.0
    %636 = vmatprep.subr.mxu0 0.0
    %637 = vmatpush2.msra.mxu0 0.0
    %638 = vmatprep.subr.mxu0 0.0
    %639 = vmatpush2.msra.mxu0 0.0
    %640 = vmatprep.subr.mxu0 0.0
    %641 = vmatpush2.msra.mxu0 0.0
    %642 = vmatprep.subr.mxu0 0.0
    %643 = vmatpush2.msra.mxu0 0.0
    %644 = vmatprep.subr.mxu0 0.0
    %645 = vmatpush2.msra.mxu0 0.0
    %646 = vmatprep.subr.mxu0 0.0
    %647 = vmatpush2.msra.mxu0 0.0
    %648 = vmatprep.subr.mxu0 0.0
    %649 = vmatpush2.msra.mxu0 0.0
    %650 = vmatprep.subr.mxu0 0.0
    %651 = vmatpush2.msra.mxu0 0.0
    %652 = vmatprep.subr.mxu0 0.0
    %653 = vmatpush2.msra.mxu0 0.0
    %654 = vmatprep.mubr.f32.mxu0 0.0
    %655 = vmatmul.mubr.f32.gmra.mxu0 %v588
    %v656 = vpop.f32.mrf.mxu0
    %v657 = vadd.f32 %v394, %v656
    %v658 = vpop.f32.mrf.mxu0
    %659 = vdwg.mxu0
    %v660 = vxor.u32 %v657, 2147483648
    %v661 = vmul.f32 %v660, 1.442695
    %v662 = vpow.pop %v661
    %v663 = vadd.f32 %v662, 1.0
    %v664 = vrcp.pop %v663
    %v665 = vmul.f32 1.0, %v664
    %v666 = vmul.f32 %v665, %v381
    %vm667 = vcmp.eq.s32.totalorder %v383, 2
    %v668 = vsel %vm667, 1, 0
    %v669 = vcvt.s32.f32 %v668
    %v670 = vmul.f32 %v669, %v66
    %v671 = vsub.f32 1.0, %v669
    %v672 = vmul.f32 %v671, %v666
    %v673 = vadd.f32 %v670, %v672
    %s674 = scalar_lea.vmem [#allocation8], 16
    %675 = vst.msk [vmem:[%s674] sm:$0x3f] %vm484, %v673
    %v676 = vlaneseq
    %v677 = vshrl.u32 %v676, 7
    %v678 = vsub.s32 3, %v677
    %v679 = vrot.slane %v225, %v678
    %v680 = vadd.f32 %v679, %v380
    %v681 = vmax.f32 %v680, 0.0
    %v683 = vsel %vm396, %v681, 0
    %685 = vmatprep.subr.mxu0 0.0
    %686 = vmatpush1.msra.mxu0 0.0
    %687 = vmatprep.subr.mxu0 0.0
    %688 = vmatpush1.msra.mxu0 0.0
    %689 = vmatprep.subr.mxu0 0.0
    %690 = vmatpush1.msra.mxu0 0.0
    %691 = vmatprep.subr.mxu0 0.0
    %692 = vmatpush1.msra.mxu0 0.0
    %693 = vmatprep.subr.mxu0 0.0
    %694 = vmatpush1.msra.mxu0 0.0
    %695 = vmatprep.subr.mxu0 0.0
    %696 = vmatpush1.msra.mxu0 0.0
    %697 = vmatprep.subr.mxu0 0.0
    %698 = vmatpush1.msra.mxu0 0.0
    %699 = vmatprep.subr.mxu0 0.0
    %700 = vmatpush1.msra.mxu0 0.0
    %701 = vmatprep.subr.mxu0 0.0
    %702 = vmatpush1.msra.mxu0 0.0
    %703 = vmatprep.subr.mxu0 0.0
    %704 = vmatpush1.msra.mxu0 0.0
    %705 = vmatprep.subr.mxu0 0.0
    %706 = vmatpush1.msra.mxu0 0.0
    %707 = vmatprep.subr.mxu0 0.0
    %708 = vmatpush1.msra.mxu0 0.0
    %709 = vmatprep.subr.mxu0 0.0
    %710 = vmatpush1.msra.mxu0 0.0
    %711 = vmatprep.subr.mxu0 0.0
    %712 = vmatpush1.msra.mxu0 0.0
    %713 = vmatprep.subr.mxu0 0.0
    %714 = vmatpush1.msra.mxu0 %v72
    %715 = vmatprep.subr.mxu0 0.0
    %716 = vmatpush1.msra.mxu0 %v71
    %717 = vmatprep.subr.mxu0 0.0
    %718 = vmatpush2.msra.mxu0 0.0
    %719 = vmatprep.subr.mxu0 0.0
    %720 = vmatpush2.msra.mxu0 0.0
    %721 = vmatprep.subr.mxu0 0.0
    %722 = vmatpush2.msra.mxu0 0.0
    %723 = vmatprep.subr.mxu0 0.0
    %724 = vmatpush2.msra.mxu0 0.0
    %725 = vmatprep.subr.mxu0 0.0
    %726 = vmatpush2.msra.mxu0 0.0
    %727 = vmatprep.subr.mxu0 0.0
    %728 = vmatpush2.msra.mxu0 0.0
    %729 = vmatprep.subr.mxu0 0.0
    %730 = vmatpush2.msra.mxu0 0.0
    %731 = vmatprep.subr.mxu0 0.0
    %732 = vmatpush2.msra.mxu0 0.0
    %733 = vmatprep.subr.mxu0 0.0
    %734 = vmatpush2.msra.mxu0 0.0
    %735 = vmatprep.subr.mxu0 0.0
    %736 = vmatpush2.msra.mxu0 0.0
    %737 = vmatprep.subr.mxu0 0.0
    %738 = vmatpush2.msra.mxu0 0.0
    %739 = vmatprep.subr.mxu0 0.0
    %740 = vmatpush2.msra.mxu0 0.0
    %741 = vmatprep.subr.mxu0 0.0
    %742 = vmatpush2.msra.mxu0 0.0
    %743 = vmatprep.subr.mxu0 0.0
    %744 = vmatpush2.msra.mxu0 0.0
    %745 = vmatprep.subr.mxu0 0.0
    %746 = vmatpush2.msra.mxu0 0.0
    %747 = vmatprep.subr.mxu0 0.0
    %748 = vmatpush2.msra.mxu0 0.0
    %749 = vmatprep.mubr.f32.mxu0 0.0
    %750 = vmatmul.mubr.f32.gmra.mxu0 %v683
    %v751 = vpop.f32.mrf.mxu0
    %v752 = vadd.f32 %v394, %v751
    %v753 = vpop.f32.mrf.mxu0
    %754 = vdwg.mxu0
    %v755 = vxor.u32 %v752, 2147483648
    %v756 = vmul.f32 %v755, 1.442695
    %v757 = vpow.pop %v756
    %v758 = vadd.f32 %v757, 1.0
    %v759 = vrcp.pop %v758
    %v760 = vmul.f32 1.0, %v759
    %v761 = vmul.f32 %v760, %v381
    %vm762 = vcmp.eq.s32.totalorder %v383, 3
    %v763 = vsel %vm762, 1, 0
    %v764 = vcvt.s32.f32 %v763
    %v765 = vmul.f32 %v764, %v66
    %v766 = vsub.f32 1.0, %v764
    %v767 = vmul.f32 %v766, %v761
    %v768 = vadd.f32 %v765, %v767
    %s769 = scalar_lea.vmem [#allocation8], 24
    %770 = vst.msk [vmem:[%s769] sm:$0x3f] %vm484, %v768
    %v771 = vlaneseq
    %v772 = vshrl.u32 %v771, 7
    %v773 = vsub.s32 4, %v772
    %v774 = vrot.slane %v225, %v773
    %v775 = vadd.f32 %v774, %v380
    %v776 = vmax.f32 %v775, 0.0
    %v778 = vsel %vm396, %v776, 0
    %780 = vmatprep.subr.mxu0 0.0
    %781 = vmatpush1.msra.mxu0 0.0
    %782 = vmatprep.subr.mxu0 0.0
    %783 = vmatpush1.msra.mxu0 0.0
    %784 = vmatprep.subr.mxu0 0.0
    %785 = vmatpush1.msra.mxu0 0.0
    %786 = vmatprep.subr.mxu0 0.0
    %787 = vmatpush1.msra.mxu0 0.0
    %788 = vmatprep.subr.mxu0 0.0
    %789 = vmatpush1.msra.mxu0 0.0
    %790 = vmatprep.subr.mxu0 0.0
    %791 = vmatpush1.msra.mxu0 0.0
    %792 = vmatprep.subr.mxu0 0.0
    %793 = vmatpush1.msra.mxu0 0.0
    %794 = vmatprep.subr.mxu0 0.0
    %795 = vmatpush1.msra.mxu0 0.0
    %796 = vmatprep.subr.mxu0 0.0
    %797 = vmatpush1.msra.mxu0 0.0
    %798 = vmatprep.subr.mxu0 0.0
    %799 = vmatpush1.msra.mxu0 0.0
    %800 = vmatprep.subr.mxu0 0.0
    %801 = vmatpush1.msra.mxu0 0.0
    %802 = vmatprep.subr.mxu0 0.0
    %803 = vmatpush1.msra.mxu0 0.0
    %804 = vmatprep.subr.mxu0 0.0
    %805 = vmatpush1.msra.mxu0 0.0
    %806 = vmatprep.subr.mxu0 0.0
    %807 = vmatpush1.msra.mxu0 0.0
    %808 = vmatprep.subr.mxu0 0.0
    %809 = vmatpush1.msra.mxu0 %v72
    %810 = vmatprep.subr.mxu0 0.0
    %811 = vmatpush1.msra.mxu0 %v71
    %812 = vmatprep.subr.mxu0 0.0
    %813 = vmatpush2.msra.mxu0 0.0
    %814 = vmatprep.subr.mxu0 0.0
    %815 = vmatpush2.msra.mxu0 0.0
    %816 = vmatprep.subr.mxu0 0.0
    %817 = vmatpush2.msra.mxu0 0.0
    %818 = vmatprep.subr.mxu0 0.0
    %819 = vmatpush2.msra.mxu0 0.0
    %820 = vmatprep.subr.mxu0 0.0
    %821 = vmatpush2.msra.mxu0 0.0
    %822 = vmatprep.subr.mxu0 0.0
    %823 = vmatpush2.msra.mxu0 0.0
    %824 = vmatprep.subr.mxu0 0.0
    %825 = vmatpush2.msra.mxu0 0.0
    %826 = vmatprep.subr.mxu0 0.0
    %827 = vmatpush2.msra.mxu0 0.0
    %828 = vmatprep.subr.mxu0 0.0
    %829 = vmatpush2.msra.mxu0 0.0
    %830 = vmatprep.subr.mxu0 0.0
    %831 = vmatpush2.msra.mxu0 0.0
    %832 = vmatprep.subr.mxu0 0.0
    %833 = vmatpush2.msra.mxu0 0.0
    %834 = vmatprep.subr.mxu0 0.0
    %835 = vmatpush2.msra.mxu0 0.0
    %836 = vmatprep.subr.mxu0 0.0
    %837 = vmatpush2.msra.mxu0 0.0
    %838 = vmatprep.subr.mxu0 0.0
    %839 = vmatpush2.msra.mxu0 0.0
    %840 = vmatprep.subr.mxu0 0.0
    %841 = vmatpush2.msra.mxu0 0.0
    %842 = vmatprep.subr.mxu0 0.0
    %843 = vmatpush2.msra.mxu0 0.0
    %844 = vmatprep.mubr.f32.mxu0 0.0
    %845 = vmatmul.mubr.f32.gmra.mxu0 %v778
    %v846 = vpop.f32.mrf.mxu0
    %v847 = vadd.f32 %v394, %v846
    %v848 = vpop.f32.mrf.mxu0
    %849 = vdwg.mxu0
    %v850 = vxor.u32 %v847, 2147483648
    %v851 = vmul.f32 %v850, 1.442695
    %v852 = vpow.pop %v851
    %v853 = vadd.f32 %v852, 1.0
    %v854 = vrcp.pop %v853
    %v855 = vmul.f32 1.0, %v854
    %v856 = vmul.f32 %v855, %v381
    %vm857 = vcmp.eq.s32.totalorder %v383, 4
    %v858 = vsel %vm857, 1, 0
    %v859 = vcvt.s32.f32 %v858
    %v860 = vmul.f32 %v859, %v66
    %v861 = vsub.f32 1.0, %v859
    %v862 = vmul.f32 %v861, %v856
    %v863 = vadd.f32 %v860, %v862
    %s864 = scalar_lea.vmem [#allocation8], 32
    %865 = vst.msk [vmem:[%s864] sm:$0x3f] %vm484, %v863
    %v866 = vlaneseq
    %v867 = vshrl.u32 %v866, 7
    %v868 = vsub.s32 5, %v867
    %v869 = vrot.slane %v225, %v868
    %v870 = vadd.f32 %v869, %v380
    %v871 = vmax.f32 %v870, 0.0
    %v873 = vsel %vm396, %v871, 0
    %875 = vmatprep.subr.mxu0 0.0
    %876 = vmatpush1.msra.mxu0 0.0
    %877 = vmatprep.subr.mxu0 0.0
    %878 = vmatpush1.msra.mxu0 0.0
    %879 = vmatprep.subr.mxu0 0.0
    %880 = vmatpush1.msra.mxu0 0.0
    %881 = vmatprep.subr.mxu0 0.0
    %882 = vmatpush1.msra.mxu0 0.0
    %883 = vmatprep.subr.mxu0 0.0
    %884 = vmatpush1.msra.mxu0 0.0
    %885 = vmatprep.subr.mxu0 0.0
    %886 = vmatpush1.msra.mxu0 0.0
    %887 = vmatprep.subr.mxu0 0.0
    %888 = vmatpush1.msra.mxu0 0.0
    %889 = vmatprep.subr.mxu0 0.0
    %890 = vmatpush1.msra.mxu0 0.0
    %891 = vmatprep.subr.mxu0 0.0
    %892 = vmatpush1.msra.mxu0 0.0
    %893 = vmatprep.subr.mxu0 0.0
    %894 = vmatpush1.msra.mxu0 0.0
    %895 = vmatprep.subr.mxu0 0.0
    %896 = vmatpush1.msra.mxu0 0.0
    %897 = vmatprep.subr.mxu0 0.0
    %898 = vmatpush1.msra.mxu0 0.0
    %899 = vmatprep.subr.mxu0 0.0
    %900 = vmatpush1.msra.mxu0 0.0
    %901 = vmatprep.subr.mxu0 0.0
    %902 = vmatpush1.msra.mxu0 0.0
    %903 = vmatprep.subr.mxu0 0.0
    %904 = vmatpush1.msra.mxu0 %v72
    %905 = vmatprep.subr.mxu0 0.0
    %906 = vmatpush1.msra.mxu0 %v71
    %907 = vmatprep.subr.mxu0 0.0
    %908 = vmatpush2.msra.mxu0 0.0
    %909 = vmatprep.subr.mxu0 0.0
    %910 = vmatpush2.msra.mxu0 0.0
    %911 = vmatprep.subr.mxu0 0.0
    %912 = vmatpush2.msra.mxu0 0.0
    %913 = vmatprep.subr.mxu0 0.0
    %914 = vmatpush2.msra.mxu0 0.0
    %915 = vmatprep.subr.mxu0 0.0
    %916 = vmatpush2.msra.mxu0 0.0
    %917 = vmatprep.subr.mxu0 0.0
    %918 = vmatpush2.msra.mxu0 0.0
    %919 = vmatprep.subr.mxu0 0.0
    %920 = vmatpush2.msra.mxu0 0.0
    %921 = vmatprep.subr.mxu0 0.0
    %922 = vmatpush2.msra.mxu0 0.0
    %923 = vmatprep.subr.mxu0 0.0
    %924 = vmatpush2.msra.mxu0 0.0
    %925 = vmatprep.subr.mxu0 0.0
    %926 = vmatpush2.msra.mxu0 0.0
    %927 = vmatprep.subr.mxu0 0.0
    %928 = vmatpush2.msra.mxu0 0.0
    %929 = vmatprep.subr.mxu0 0.0
    %930 = vmatpush2.msra.mxu0 0.0
    %931 = vmatprep.subr.mxu0 0.0
    %932 = vmatpush2.msra.mxu0 0.0
    %933 = vmatprep.subr.mxu0 0.0
    %934 = vmatpush2.msra.mxu0 0.0
    %935 = vmatprep.subr.mxu0 0.0
    %936 = vmatpush2.msra.mxu0 0.0
    %937 = vmatprep.subr.mxu0 0.0
    %938 = vmatpush2.msra.mxu0 0.0
    %939 = vmatprep.mubr.f32.mxu0 0.0
    %940 = vmatmul.mubr.f32.gmra.mxu0 %v873
    %v941 = vpop.f32.mrf.mxu0
    %v942 = vadd.f32 %v394, %v941
    %v943 = vpop.f32.mrf.mxu0
    %944 = vdwg.mxu0
    %v945 = vxor.u32 %v942, 2147483648
    %v946 = vmul.f32 %v945, 1.442695
    %v947 = vpow.pop %v946
    %v948 = vadd.f32 %v947, 1.0
    %v949 = vrcp.pop %v948
    %v950 = vmul.f32 1.0, %v949
    %v951 = vmul.f32 %v950, %v381
    %vm952 = vcmp.eq.s32.totalorder %v383, 5
    %v953 = vsel %vm952, 1, 0
    %v954 = vcvt.s32.f32 %v953
    %v955 = vmul.f32 %v954, %v66
    %v956 = vsub.f32 1.0, %v954
    %v957 = vmul.f32 %v956, %v951
    %v958 = vadd.f32 %v955, %v957
    %s959 = scalar_lea.vmem [#allocation8], 40
    %960 = vst.msk [vmem:[%s959] sm:$0x3f] %vm484, %v958
    // Predicated region
    $region46: #{interaction_gate.1} parent=1 // pred_check
      _
    $region47: #{interaction_gate.1} parent=1 // pred_check_branch
      %962 = sbr.rel (0) target = $region49
    $region48: #{interaction_gate.1} parent=1 // pred_region
      %s964 = ssub.s32 768, 768
      %965 = vsyncadd [#allocation4], %s964
      %s966 = sshll.u32 [#allocation8], 4
      %s967 = int_to_ptr.vmem [resolvable:$true] %s966
      %972 = dma.vmem_to_hbm [thread:$0]  %s967, 768, %s8, [#allocation4], 128, 128, 8
    $region49: #{interaction_gate.1} parent=1 // pred_fallthru
      _
    // Predicated region
    $region50: #{interaction_gate.1} parent=1 // pred_check
      _
    $region51: #{interaction_gate.1} parent=1 // pred_check_branch
      %974 = sbr.rel (0) target = $region53
    $region52: #{interaction_gate.1} parent=1 // pred_region
      %975 = dma.done [#allocation4], 768
    $region53: #{interaction_gate.1} parent=1 // pred_fallthru
      _
    %976 = vsyncpa [#allocation3], 1
    %977 = vsyncpa [#allocation6], 1
    %978 = vsyncpa [#allocation4], 1

</llo_original>
